<compile_context>
chip_gen: v7x
topology: tpu7x:2x2x1
jax: 0.10.0
libtpu: 0.0.40
codegen_flags: <defaults>
</compile_context>

<pallas_src>
import functools

import jax
import jax.numpy as jnp
from jax import lax
from jax.experimental import pallas as pl
from jax.experimental.pallas import tpu as pltpu


def _layer_norm(v, gamma, beta, eps=1e-5):
    mu = jnp.mean(v, axis=-1, keepdims=True)
    d = v - mu
    var = jnp.mean(d * d, axis=-1, keepdims=True)
    return d * lax.rsqrt(var + eps) * gamma + beta


def block_kernel(x_ref, bp_ref, g2_ref, be2_ref, w1_ref, b1_ref, w2_ref, b2_ref,
                 o_ref):
    # x_ref : (TM, C)  f32 row tile of the flattened (B*T, C) activations
    # bp_ref: (1, C)   proj bias;  g2/be2: (1, C) ln2 affine (f32)
    # w1_ref: (C, 4C)  bf16;  b1_ref: (1, 4C) f32
    # w2_ref: (4C, C)  bf16;  b2_ref: (1, C)  f32
    x = x_ref[...]

    # sa(ln1(x)) constant-folds to the projection bias: the RotationalHead
    # multiplies its transform by 0, so the head output is exactly zero and
    # proj(0) + b == b.  ln1 and all attention matmuls are therefore dead code.
    # TODO(synk): training-mode dropout not implemented (eval-mode identity).
    y = x + bp_ref[...]

    # ln2 + FeedForward + residual (bf16 MXU inputs, f32 accumulation).
    x2 = _layer_norm(y, g2_ref[...], be2_ref[...])
    h = jnp.dot(x2.astype(jnp.bfloat16), w1_ref[...],
                preferred_element_type=jnp.float32) + b1_ref[...]
    h = jnp.maximum(h, 0.0)
    ff = jnp.dot(h.astype(jnp.bfloat16), w2_ref[...],
                 preferred_element_type=jnp.float32) + b2_ref[...]

    o_ref[...] = (y + ff).astype(o_ref.dtype)


@functools.partial(jax.jit, static_argnames=("row_tile",))
def block_forward(x, params, *, row_tile=256):
    """Fused Block forward.  x: (B, T, C) float32; params use PyTorch weight layouts."""
    B, T, C = x.shape
    N = B * T
    H = params["ff_w1"].shape[0]

    # Row tile: multiple of 8 that divides N, lane-dense C required for tiling.
    # TODO(synk): when C % 128 != 0, pad channels to 128 with LN masking instead
    # of falling back to a single full block.
    tm = row_tile
    if (C % 128 != 0) or (tm > N) or (N % tm != 0) or (tm % 8 != 0):
        tm = N
    grid = (N // tm,)

    row = lambda v: v.reshape(1, -1).astype(jnp.float32)
    const = lambda shape: pl.BlockSpec(shape, lambda i: (0, 0))

    flops = 4 * N * C * H                                   # two GEMMs, 2 flops/MAC
    bytes_accessed = 2 * N * C * 4 + 2 * C * H * 2 + (3 * C + H) * 4

    out_flat = pl.pallas_call(
        block_kernel,
        out_shape=jax.ShapeDtypeStruct((N, C), x.dtype),
        grid=grid,
        in_specs=[
            pl.BlockSpec((tm, C), lambda i: (i, 0)),        # x row tile
            const((1, C)),                                  # proj bias
            const((1, C)), const((1, C)),                   # ln2 gamma / beta
            const((C, H)), const((1, H)),                   # W1^T (bf16), b1
            const((H, C)), const((1, C)),                   # W2^T (bf16), b2
        ],
        out_specs=pl.BlockSpec((tm, C), lambda i: (i, 0)),
        input_output_aliases={0: 0},                        # out reuses x's HBM slab
        compiler_params=pltpu.CompilerParams(
            dimension_semantics=("parallel",)),
        cost_estimate=pl.CostEstimate(flops=flops, transcendentals=N,
                                      bytes_accessed=bytes_accessed),
    )(
        x.reshape(N, C).astype(jnp.float32),
        row(params["proj_b"]),
        row(params["ln2_g"]), row(params["ln2_b"]),
        params["ff_w1"].T.astype(jnp.bfloat16), row(params["ff_b1"]),
        params["ff_w2"].T.astype(jnp.bfloat16), row(params["ff_b2"]),
    )
    return out_flat.reshape(B, T, C)


def block_reference(x, params):
    """Pure-JAX mirror of the PyTorch Block.forward (eval mode), un-collapsed."""
    B, T, C = x.shape
    hi = jax.lax.Precision.HIGHEST

    def ln(v, g, b, eps=1e-5):
        mu = v.mean(-1, keepdims=True)
        var = ((v - mu) ** 2).mean(-1, keepdims=True)
        return (v - mu) / jnp.sqrt(var + eps) * g + b

    # --- sa(ln1(x)) : single RotationalHead + proj ---
    x1 = ln(x, params["ln1_g"], params["ln1_b"])
    transform = jnp.einsum("btc,oc->bto", x1, params["head_w"], precision=hi)
    transform = transform.reshape(B, T, C, C) * 0
    out = jnp.einsum("bcij,btj->btcj", transform, x1, precision=hi)          # (B,T,T,C)
    tril = jnp.tril(jnp.ones((T, T), jnp.float32))
    out = jnp.where((tril == 0)[None, :, :, None], 0.0, out)
    head = out.sum(axis=2)                                                   # (B,T,C)
    sa = jnp.einsum("btc,oc->bto", head, params["proj_w"], precision=hi) + params["proj_b"]
    y = x + sa

    # --- ffwd(ln2(y)) ---
    x2 = ln(y, params["ln2_g"], params["ln2_b"])
    h = jnp.maximum(
        jnp.einsum("btc,hc->bth", x2, params["ff_w1"], precision=hi) + params["ff_b1"], 0.0)
    ff = jnp.einsum("bth,ch->btc", h, params["ff_w2"], precision=hi) + params["ff_b2"]
    return y + ff


if __name__ == "__main__":
    # n_embd = C, n_head = 1 (the PyTorch module is only shape-consistent for
    # n_head == 1), block_size >= T, dropout = 0.0 (eval-mode identity).
    # C = 128 keeps the kernel lane-dense; row_tile = 32 exercises a 2-step grid.
    B, T, C = 2, 32, 128
    H = 4 * C

    key = jax.random.PRNGKey(0)
    ks = jax.random.split(key, 12)
    x = jax.random.normal(ks[0], (B, T, C), dtype=jnp.float32)
    params = {
        "head_w": jax.random.normal(ks[1], (C * C, C), jnp.float32) * 0.02,
        "proj_w": jax.random.normal(ks[2], (C, C), jnp.float32) * 0.02,
        "proj_b": jax.random.normal(ks[3], (C,), jnp.float32) * 0.02,
        "ff_w1": jax.random.normal(ks[4], (H, C), jnp.float32) * 0.02,
        "ff_b1": jax.random.normal(ks[5], (H,), jnp.float32) * 0.02,
        "ff_w2": jax.random.normal(ks[6], (C, H), jnp.float32) * 0.02,
        "ff_b2": jax.random.normal(ks[7], (C,), jnp.float32) * 0.02,
        "ln1_g": 1.0 + 0.1 * jax.random.normal(ks[8], (C,), jnp.float32),
        "ln1_b": 0.1 * jax.random.normal(ks[9], (C,), jnp.float32),
        "ln2_g": 1.0 + 0.1 * jax.random.normal(ks[10], (C,), jnp.float32),
        "ln2_b": 0.1 * jax.random.normal(ks[11], (C,), jnp.float32),
    }

    ref = block_reference(x, params)       # gold f32 reference (before aliased call)
    out = jax.block_until_ready(block_forward(x, params, row_tile=32))

    assert out.shape == (B, T, C), out.shape
    assert out.dtype == jnp.float32, out.dtype
    max_err = float(jnp.max(jnp.abs(out - ref)))
    # bf16 MXU inputs with f32 accumulation -> ~1e-3 level agreement vs f32 gold.
    assert jnp.allclose(out, ref, atol=5e-3, rtol=5e-3), max_err

    print("KERNEL_OK")
</pallas_src>

<mosaic_0001>
module attributes {stable_mosaic.version = 11 : i64} {
  func.func @block_kernel(%arg0: i32, %arg1: memref<32x128xf32, #tpu.memory_space<vmem>>, %arg2: memref<1x128xf32, #tpu.memory_space<vmem>>, %arg3: memref<1x128xf32, #tpu.memory_space<vmem>>, %arg4: memref<1x128xf32, #tpu.memory_space<vmem>>, %arg5: memref<128x512xbf16, #tpu.memory_space<vmem>>, %arg6: memref<1x512xf32, #tpu.memory_space<vmem>>, %arg7: memref<512x128xbf16, #tpu.memory_space<vmem>>, %arg8: memref<1x128xf32, #tpu.memory_space<vmem>>, %arg9: memref<32x128xf32, #tpu.memory_space<vmem>>) attributes {dimension_semantics = [#tpu.dimension_semantics<parallel>], iteration_bounds = array<i64: 2>, scalar_prefetch = 0 : i64, scratch_operands = 0 : i64, tpu.core_type = #tpu.core_type<tc>, window_params = [{transform_indices = @transform_0, window_bounds = array<i64: 32, 128>}, {pipeline_mode = #tpu.pipeline_mode<synchronous>, transform_indices = @transform_1, window_bounds = array<i64: 1, 128>}, {pipeline_mode = #tpu.pipeline_mode<synchronous>, transform_indices = @transform_2, window_bounds = array<i64: 1, 128>}, {pipeline_mode = #tpu.pipeline_mode<synchronous>, transform_indices = @transform_3, window_bounds = array<i64: 1, 128>}, {pipeline_mode = #tpu.pipeline_mode<synchronous>, transform_indices = @transform_4, window_bounds = array<i64: 128, 512>}, {pipeline_mode = #tpu.pipeline_mode<synchronous>, transform_indices = @transform_5, window_bounds = array<i64: 1, 512>}, {pipeline_mode = #tpu.pipeline_mode<synchronous>, transform_indices = @transform_6, window_bounds = array<i64: 512, 128>}, {pipeline_mode = #tpu.pipeline_mode<synchronous>, transform_indices = @transform_7, window_bounds = array<i64: 1, 128>}, {transform_indices = @transform_8, window_bounds = array<i64: 32, 128>}]} {
    %c0 = arith.constant 0 : index
    %c0_0 = arith.constant 0 : index
    %0 = vector.load %arg1[%c0, %c0_0] : memref<32x128xf32, #tpu.memory_space<vmem>>, vector<32x128xf32>
    %c0_1 = arith.constant 0 : index
    %c0_2 = arith.constant 0 : index
    %1 = vector.load %arg2[%c0_1, %c0_2] : memref<1x128xf32, #tpu.memory_space<vmem>>, vector<1x128xf32>
    %2 = vector.broadcast %1 : vector<1x128xf32> to vector<32x128xf32>
    %3 = arith.addf %0, %2 : vector<32x128xf32>
    %c0_3 = arith.constant 0 : index
    %c0_4 = arith.constant 0 : index
    %4 = vector.load %arg3[%c0_3, %c0_4] : memref<1x128xf32, #tpu.memory_space<vmem>>, vector<1x128xf32>
    %c0_5 = arith.constant 0 : index
    %c0_6 = arith.constant 0 : index
    %5 = vector.load %arg4[%c0_5, %c0_6] : memref<1x128xf32, #tpu.memory_space<vmem>>, vector<1x128xf32>
    %cst = arith.constant dense<0.000000e+00> : vector<32xf32>
    %6 = vector.multi_reduction <add>, %3, %cst [1] : vector<32x128xf32> to vector<32xf32>
    %7 = vector.shape_cast %6 : vector<32xf32> to vector<32x1xf32>
    %cst_7 = arith.constant 1.280000e+02 : f32
    %8 = vector.broadcast %cst_7 : f32 to vector<32x1xf32>
    %9 = arith.divf %7, %8 : vector<32x1xf32>
    %10 = vector.broadcast %9 : vector<32x1xf32> to vector<32x128xf32>
    %11 = arith.subf %3, %10 : vector<32x128xf32>
    %12 = arith.mulf %11, %11 : vector<32x128xf32>
    %cst_8 = arith.constant dense<0.000000e+00> : vector<32xf32>
    %13 = vector.multi_reduction <add>, %12, %cst_8 [1] : vector<32x128xf32> to vector<32xf32>
    %14 = vector.shape_cast %13 : vector<32xf32> to vector<32x1xf32>
    %cst_9 = arith.constant 1.280000e+02 : f32
    %15 = vector.broadcast %cst_9 : f32 to vector<32x1xf32>
    %16 = arith.divf %14, %15 : vector<32x1xf32>
    %cst_10 = arith.constant 9.99999974E-6 : f32
    %17 = vector.broadcast %cst_10 : f32 to vector<32x1xf32>
    %18 = arith.addf %16, %17 : vector<32x1xf32>
    %19 = math.rsqrt %18 : vector<32x1xf32>
    %20 = vector.broadcast %19 : vector<32x1xf32> to vector<32x128xf32>
    %21 = arith.mulf %11, %20 : vector<32x128xf32>
    %22 = vector.broadcast %4 : vector<1x128xf32> to vector<32x128xf32>
    %23 = arith.mulf %21, %22 : vector<32x128xf32>
    %24 = vector.broadcast %5 : vector<1x128xf32> to vector<32x128xf32>
    %25 = arith.addf %23, %24 : vector<32x128xf32>
    %26 = arith.truncf %25 : vector<32x128xf32> to vector<32x128xbf16>
    %c0_11 = arith.constant 0 : index
    %c0_12 = arith.constant 0 : index
    %27 = vector.load %arg5[%c0_11, %c0_12] : memref<128x512xbf16, #tpu.memory_space<vmem>>, vector<128x512xbf16>
    %cst_13 = arith.constant dense<0.000000e+00> : vector<32x512xf32>
    %28 = tpu.matmul %26, %27, %cst_13 {dimension_numbers = #tpu.dot_dimension_numbers<[1], [0], [0], [1], [0, 0, 1, 1], [], []>} : vector<32x128xbf16>, vector<128x512xbf16>, vector<32x512xf32> -> vector<32x512xf32>
    %c0_14 = arith.constant 0 : index
    %c0_15 = arith.constant 0 : index
    %29 = vector.load %arg6[%c0_14, %c0_15] : memref<1x512xf32, #tpu.memory_space<vmem>>, vector<1x512xf32>
    %30 = vector.broadcast %29 : vector<1x512xf32> to vector<32x512xf32>
    %31 = arith.addf %28, %30 : vector<32x512xf32>
    %cst_16 = arith.constant 0.000000e+00 : f32
    %32 = vector.broadcast %cst_16 : f32 to vector<32x512xf32>
    %33 = arith.maximumf %31, %32 : vector<32x512xf32>
    %34 = arith.truncf %33 : vector<32x512xf32> to vector<32x512xbf16>
    %c0_17 = arith.constant 0 : index
    %c0_18 = arith.constant 0 : index
    %35 = vector.load %arg7[%c0_17, %c0_18] : memref<512x128xbf16, #tpu.memory_space<vmem>>, vector<512x128xbf16>
    %cst_19 = arith.constant dense<0.000000e+00> : vector<32x128xf32>
    %36 = tpu.matmul %34, %35, %cst_19 {dimension_numbers = #tpu.dot_dimension_numbers<[1], [0], [0], [1], [0, 0, 1, 1], [], []>} : vector<32x512xbf16>, vector<512x128xbf16>, vector<32x128xf32> -> vector<32x128xf32>
    %c0_20 = arith.constant 0 : index
    %c0_21 = arith.constant 0 : index
    %37 = vector.load %arg8[%c0_20, %c0_21] : memref<1x128xf32, #tpu.memory_space<vmem>>, vector<1x128xf32>
    %38 = vector.broadcast %37 : vector<1x128xf32> to vector<32x128xf32>
    %39 = arith.addf %36, %38 : vector<32x128xf32>
    %40 = arith.addf %3, %39 : vector<32x128xf32>
    %c0_22 = arith.constant 0 : index
    %c0_23 = arith.constant 0 : index
    %41 = vector.load %arg9[%c0_22, %c0_23] : memref<32x128xf32, #tpu.memory_space<vmem>>, vector<32x128xf32>
    tpu.vector_store %arg9[%c0_22, %c0_23], %40 {strides = array<i32>} : memref<32x128xf32, #tpu.memory_space<vmem>>, vector<32x128xf32>,
    return
  }
  func.func @transform_0(%arg0: i32) -> (i32, i32) {
    %c0_i32 = arith.constant 0 : i32
    %c0_i32_0 = arith.constant 0 : i32
    return %arg0, %c0_i32 : i32, i32
  }
  func.func @transform_1(%arg0: i32) -> (i32, i32) {
    %c0_i32 = arith.constant 0 : i32
    %c0_i32_0 = arith.constant 0 : i32
    %c0_i32_1 = arith.constant 0 : i32
    return %c0_i32, %c0_i32_0 : i32, i32
  }
  func.func @transform_2(%arg0: i32) -> (i32, i32) {
    %c0_i32 = arith.constant 0 : i32
    %c0_i32_0 = arith.constant 0 : i32
    %c0_i32_1 = arith.constant 0 : i32
    return %c0_i32, %c0_i32_0 : i32, i32
  }
  func.func @transform_3(%arg0: i32) -> (i32, i32) {
    %c0_i32 = arith.constant 0 : i32
    %c0_i32_0 = arith.constant 0 : i32
    %c0_i32_1 = arith.constant 0 : i32
    return %c0_i32, %c0_i32_0 : i32, i32
  }
  func.func @transform_4(%arg0: i32) -> (i32, i32) {
    %c0_i32 = arith.constant 0 : i32
    %c0_i32_0 = arith.constant 0 : i32
    %c0_i32_1 = arith.constant 0 : i32
    return %c0_i32, %c0_i32_0 : i32, i32
  }
  func.func @transform_5(%arg0: i32) -> (i32, i32) {
    %c0_i32 = arith.constant 0 : i32
    %c0_i32_0 = arith.constant 0 : i32
    %c0_i32_1 = arith.constant 0 : i32
    return %c0_i32, %c0_i32_0 : i32, i32
  }
  func.func @transform_6(%arg0: i32) -> (i32, i32) {
    %c0_i32 = arith.constant 0 : i32
    %c0_i32_0 = arith.constant 0 : i32
    %c0_i32_1 = arith.constant 0 : i32
    return %c0_i32, %c0_i32_0 : i32, i32
  }
  func.func @transform_7(%arg0: i32) -> (i32, i32) {
    %c0_i32 = arith.constant 0 : i32
    %c0_i32_0 = arith.constant 0 : i32
    %c0_i32_1 = arith.constant 0 : i32
    return %c0_i32, %c0_i32_0 : i32, i32
  }
  func.func @transform_8(%arg0: i32) -> (i32, i32) {
    %c0_i32 = arith.constant 0 : i32
    %c0_i32_0 = arith.constant 0 : i32
    return %arg0, %c0_i32 : i32, i32
  }
}

</mosaic_0001>

<llo_original>
// kernel: block_forward.1
$region0: #{block_forward.1}
  #allocation0 [shape = 'u32[]', space=smem, size = 0x4, offset = 0x4, fixed_abs, tag = 'smem constant byte address 0x4 - core index']
  #allocation1 [shape = 'u32[144,128]{1,0:T(1,128)}', space=vmem, size = 0x12000, scoped, tag = 'internal scratch']
  %s0 = inlined_call_operand.vmem [shape: f32[64,128], index: 0, kind: input, shape index: {}, may-alias: {0,8}]
  %s1 = inlined_call_operand.vmem [shape: f32[1,128], index: 1, kind: input, shape index: {}]
  %s2 = inlined_call_operand.vmem [shape: f32[1,128], index: 2, kind: input, shape index: {}]
  %s3 = inlined_call_operand.vmem [shape: f32[1,128], index: 3, kind: input, shape index: {}]
  %s4 = inlined_call_operand.vmem [shape: bf16[128,512], index: 4, kind: input, shape index: {}]
  %s5 = inlined_call_operand.vmem [shape: f32[1,512], index: 5, kind: input, shape index: {}]
  %s6 = inlined_call_operand.vmem [shape: bf16[512,128], index: 6, kind: input, shape index: {}]
  %s7 = inlined_call_operand.vmem [shape: f32[1,128], index: 7, kind: input, shape index: {}]
  %s8 = inlined_call_operand.vmem [shape: f32[64,128], index: 8, kind: output, shape index: {}, may-alias: {0,8}]
  %s9 = sld [smem:[#allocation0]]
  $region65: #{block_forward.1} parent=0
    _
  %s11 = ssub.s32 1, %s9
  %s12 = scalar_select 0, %s11, %s9
  loop: start=0, step=1, limit=4
  $region2: #{block_forward.1} parent=0 // loop_pre_header
    _
  $region3: #{block_forward.1} parent=0 // loop_header
    %s14 = sphi 0, %s18
    %p15 = scmp.ge.s32.totalorder %s14, 4
    %s24 = sphi 0, %s26
    %s27 = sphi 0, %s24
    %s28 = sphi 0, %s27
    %s44 = sphi 0, %s28
    %s48 = sphi 0, %s48
    %s50 = sphi 0, %s48
    %s51 = sphi 0, %s50
    %s65 = sphi 0, %s51
    %s69 = sphi 0, %s69
    %s71 = sphi 0, %s69
    %s72 = sphi 0, %s71
    %s86 = sphi 0, %s72
    %s90 = sphi 0, %s90
    %s92 = sphi 0, %s90
    %s93 = sphi 0, %s92
    %s107 = sphi 0, %s93
    %s111 = sphi 0, %s111
    %s113 = sphi 0, %s111
    %s114 = sphi 0, %s113
    %s128 = sphi 0, %s114
    %s132 = sphi 0, %s132
    %s134 = sphi 0, %s132
    %s135 = sphi 0, %s134
    %s149 = sphi 0, %s135
    %s153 = sphi 0, %s153
    %s155 = sphi 0, %s153
    %s156 = sphi 0, %s155
    %s170 = sphi 0, %s156
    %s174 = sphi 0, %s174
    %s176 = sphi 0, %s174
    %s177 = sphi 0, %s176
    %s191 = sphi 0, %s177
    %s197 = sphi 0, %s199
    %s200 = sphi 0, %s197
    %s201 = sphi 0, %s200
    %s217 = sphi 0, %s201
  $region4: #{block_forward.1} parent=0 // loop_header_branch
    %17 = sbr.rel (%p15) target = $region8
  $region5: #{block_forward.1} parent=0 // loop_body
    %s19 = ssub.s32 %s14, 1
    %s20 = ssub.s32 %s14, 2
    %s21 = sadd.s32 %s14, 1
    %s22 = ssub.s32 %s14, %s21
    %p23 = scmp.eq.s32.totalorder %s22, 0
    %s25 = sadd.s32 %s24, 1
    %s26 = scalar_select %p23, %s24, %s25
    %p29 = pneg %p23
    %p30 = scmp.eq.s32.totalorder %s14, 1
    %p31 = por %p29, %p30
    %p32 = scmp.ne.s32.totalorder %s24, %s27
    %p33 = scmp.eq.s32.totalorder %s14, 0
    %p34 = por %p32, %p33
    %p35 = scmp.ne.s32.totalorder %s24, %s27
    %p36 = scmp.eq.s32.totalorder %s19, 1
    %p37 = por %p35, %p36
    %p38 = scmp.ne.s32.totalorder %s27, %s28
    %p39 = scmp.eq.s32.totalorder %s19, 0
    %p40 = por %p38, %p39
    %p41 = scmp.ne.s32.totalorder %s27, %s28
    %p42 = scmp.eq.s32.totalorder %s20, 1
    %p43 = por %p41, %p42
    %p45 = scmp.ne.s32.totalorder %s28, %s44
    %p46 = scmp.eq.s32.totalorder %s20, 0
    %p47 = por %p45, %p46
    %s49 = sadd.s32 %s48, 1
    %p52 = scmp.eq.s32.totalorder %s14, 1
    %p53 = scmp.ne.s32.totalorder %s48, %s50
    %p54 = scmp.eq.s32.totalorder %s14, 0
    %p55 = por %p53, %p54
    %p56 = scmp.ne.s32.totalorder %s48, %s50
    %p57 = scmp.eq.s32.totalorder %s19, 1
    %p58 = por %p56, %p57
    %p59 = scmp.ne.s32.totalorder %s50, %s51
    %p60 = scmp.eq.s32.totalorder %s19, 0
    %p61 = por %p59, %p60
    %p62 = scmp.ne.s32.totalorder %s50, %s51
    %p63 = scmp.eq.s32.totalorder %s20, 1
    %p64 = por %p62, %p63
    %p66 = scmp.ne.s32.totalorder %s51, %s65
    %p67 = scmp.eq.s32.totalorder %s20, 0
    %p68 = por %p66, %p67
    %s70 = sadd.s32 %s69, 1
    %p73 = scmp.eq.s32.totalorder %s14, 1
    %p74 = scmp.ne.s32.totalorder %s69, %s71
    %p75 = scmp.eq.s32.totalorder %s14, 0
    %p76 = por %p74, %p75
    %p77 = scmp.ne.s32.totalorder %s69, %s71
    %p78 = scmp.eq.s32.totalorder %s19, 1
    %p79 = por %p77, %p78
    %p80 = scmp.ne.s32.totalorder %s71, %s72
    %p81 = scmp.eq.s32.totalorder %s19, 0
    %p82 = por %p80, %p81
    %p83 = scmp.ne.s32.totalorder %s71, %s72
    %p84 = scmp.eq.s32.totalorder %s20, 1
    %p85 = por %p83, %p84
    %p87 = scmp.ne.s32.totalorder %s72, %s86
    %p88 = scmp.eq.s32.totalorder %s20, 0
    %p89 = por %p87, %p88
    %s91 = sadd.s32 %s90, 1
    %p94 = scmp.eq.s32.totalorder %s14, 1
    %p95 = scmp.ne.s32.totalorder %s90, %s92
    %p96 = scmp.eq.s32.totalorder %s14, 0
    %p97 = por %p95, %p96
    %p98 = scmp.ne.s32.totalorder %s90, %s92
    %p99 = scmp.eq.s32.totalorder %s19, 1
    %p100 = por %p98, %p99
    %p101 = scmp.ne.s32.totalorder %s92, %s93
    %p102 = scmp.eq.s32.totalorder %s19, 0
    %p103 = por %p101, %p102
    %p104 = scmp.ne.s32.totalorder %s92, %s93
    %p105 = scmp.eq.s32.totalorder %s20, 1
    %p106 = por %p104, %p105
    %p108 = scmp.ne.s32.totalorder %s93, %s107
    %p109 = scmp.eq.s32.totalorder %s20, 0
    %p110 = por %p108, %p109
    %s112 = sadd.s32 %s111, 1
    %p115 = scmp.eq.s32.totalorder %s14, 1
    %p116 = scmp.ne.s32.totalorder %s111, %s113
    %p117 = scmp.eq.s32.totalorder %s14, 0
    %p118 = por %p116, %p117
    %p119 = scmp.ne.s32.totalorder %s111, %s113
    %p120 = scmp.eq.s32.totalorder %s19, 1
    %p121 = por %p119, %p120
    %p122 = scmp.ne.s32.totalorder %s113, %s114
    %p123 = scmp.eq.s32.totalorder %s19, 0
    %p124 = por %p122, %p123
    %p125 = scmp.ne.s32.totalorder %s113, %s114
    %p126 = scmp.eq.s32.totalorder %s20, 1
    %p127 = por %p125, %p126
    %p129 = scmp.ne.s32.totalorder %s114, %s128
    %p130 = scmp.eq.s32.totalorder %s20, 0
    %p131 = por %p129, %p130
    %s133 = sadd.s32 %s132, 1
    %p136 = scmp.eq.s32.totalorder %s14, 1
    %p137 = scmp.ne.s32.totalorder %s132, %s134
    %p138 = scmp.eq.s32.totalorder %s14, 0
    %p139 = por %p137, %p138
    %p140 = scmp.ne.s32.totalorder %s132, %s134
    %p141 = scmp.eq.s32.totalorder %s19, 1
    %p142 = por %p140, %p141
    %p143 = scmp.ne.s32.totalorder %s134, %s135
    %p144 = scmp.eq.s32.totalorder %s19, 0
    %p145 = por %p143, %p144
    %p146 = scmp.ne.s32.totalorder %s134, %s135
    %p147 = scmp.eq.s32.totalorder %s20, 1
    %p148 = por %p146, %p147
    %p150 = scmp.ne.s32.totalorder %s135, %s149
    %p151 = scmp.eq.s32.totalorder %s20, 0
    %p152 = por %p150, %p151
    %s154 = sadd.s32 %s153, 1
    %p157 = scmp.eq.s32.totalorder %s14, 1
    %p158 = scmp.ne.s32.totalorder %s153, %s155
    %p159 = scmp.eq.s32.totalorder %s14, 0
    %p160 = por %p158, %p159
    %p161 = scmp.ne.s32.totalorder %s153, %s155
    %p162 = scmp.eq.s32.totalorder %s19, 1
    %p163 = por %p161, %p162
    %p164 = scmp.ne.s32.totalorder %s155, %s156
    %p165 = scmp.eq.s32.totalorder %s19, 0
    %p166 = por %p164, %p165
    %p167 = scmp.ne.s32.totalorder %s155, %s156
    %p168 = scmp.eq.s32.totalorder %s20, 1
    %p169 = por %p167, %p168
    %p171 = scmp.ne.s32.totalorder %s156, %s170
    %p172 = scmp.eq.s32.totalorder %s20, 0
    %p173 = por %p171, %p172
    %s175 = sadd.s32 %s174, 1
    %p178 = scmp.eq.s32.totalorder %s14, 1
    %p179 = scmp.ne.s32.totalorder %s174, %s176
    %p180 = scmp.eq.s32.totalorder %s14, 0
    %p181 = por %p179, %p180
    %p182 = scmp.ne.s32.totalorder %s174, %s176
    %p183 = scmp.eq.s32.totalorder %s19, 1
    %p184 = por %p182, %p183
    %p185 = scmp.ne.s32.totalorder %s176, %s177
    %p186 = scmp.eq.s32.totalorder %s19, 0
    %p187 = por %p185, %p186
    %p188 = scmp.ne.s32.totalorder %s176, %s177
    %p189 = scmp.eq.s32.totalorder %s20, 1
    %p190 = por %p188, %p189
    %p192 = scmp.ne.s32.totalorder %s177, %s191
    %p193 = scmp.eq.s32.totalorder %s20, 0
    %p194 = por %p192, %p193
    %s195 = ssub.s32 %s14, %s21
    %p196 = scmp.eq.s32.totalorder %s195, 0
    %s198 = sadd.s32 %s197, 1
    %s199 = scalar_select %p196, %s197, %s198
    %p202 = pneg %p196
    %p203 = scmp.eq.s32.totalorder %s14, 1
    %p204 = por %p202, %p203
    %p205 = scmp.ne.s32.totalorder %s197, %s200
    %p206 = scmp.eq.s32.totalorder %s14, 0
    %p207 = por %p205, %p206
    %p208 = scmp.ne.s32.totalorder %s197, %s200
    %p209 = scmp.eq.s32.totalorder %s19, 1
    %p210 = por %p208, %p209
    %p211 = scmp.ne.s32.totalorder %s200, %s201
    %p212 = scmp.eq.s32.totalorder %s19, 0
    %p213 = por %p211, %p212
    %p214 = scmp.ne.s32.totalorder %s200, %s201
    %p215 = scmp.eq.s32.totalorder %s20, 1
    %p216 = por %p214, %p215
    %p218 = scmp.ne.s32.totalorder %s201, %s217
    %p219 = scmp.eq.s32.totalorder %s20, 0
    %p220 = por %p218, %p219
    %p221 = scmp.le.s32.totalorder 1, %s14
    %p222 = scmp.lt.s32.totalorder %s14, 3
    %p223 = pnand %p221, %p222
    %p224 = pneg %p223
    // Predicated region
    $region9: #{block_forward.1} parent=5 // pred_check
      _
    $region10: #{block_forward.1} parent=5 // pred_check_branch
      %226 = sbr.rel (%p223) target = $region12
    $region11: #{block_forward.1} parent=5 // pred_region
      %s227 = ssub.s32 %s14, 1
      // Predicated region
      $region13: #{block_forward.1} parent=11 // pred_check
        %p228 = pneg %p61
      $region14: #{block_forward.1} parent=11 // pred_check_branch
        %230 = sbr.rel (%p228) target = $region16
      $region15: #{block_forward.1} parent=11 // pred_region
        _
      $region16: #{block_forward.1} parent=11 // pred_fallthru
        _
      // Predicated region
      $region17: #{block_forward.1} parent=11 // pred_check
        %p231 = pneg %p82
      $region18: #{block_forward.1} parent=11 // pred_check_branch
        %233 = sbr.rel (%p231) target = $region20
      $region19: #{block_forward.1} parent=11 // pred_region
        _
      $region20: #{block_forward.1} parent=11 // pred_fallthru
        _
      // Predicated region
      $region21: #{block_forward.1} parent=11 // pred_check
        %p234 = pneg %p103
      $region22: #{block_forward.1} parent=11 // pred_check_branch
        %236 = sbr.rel (%p234) target = $region24
      $region23: #{block_forward.1} parent=11 // pred_region
        _
      $region24: #{block_forward.1} parent=11 // pred_fallthru
        _
      // Predicated region
      $region25: #{block_forward.1} parent=11 // pred_check
        %p237 = pneg %p124
      $region26: #{block_forward.1} parent=11 // pred_check_branch
        %239 = sbr.rel (%p237) target = $region28
      $region27: #{block_forward.1} parent=11 // pred_region
        _
      $region28: #{block_forward.1} parent=11 // pred_fallthru
        _
      // Predicated region
      $region29: #{block_forward.1} parent=11 // pred_check
        %p240 = pneg %p145
      $region30: #{block_forward.1} parent=11 // pred_check_branch
        %242 = sbr.rel (%p240) target = $region32
      $region31: #{block_forward.1} parent=11 // pred_region
        _
      $region32: #{block_forward.1} parent=11 // pred_fallthru
        _
      // Predicated region
      $region33: #{block_forward.1} parent=11 // pred_check
        %p243 = pneg %p166
      $region34: #{block_forward.1} parent=11 // pred_check_branch
        %245 = sbr.rel (%p243) target = $region36
      $region35: #{block_forward.1} parent=11 // pred_region
        _
      $region36: #{block_forward.1} parent=11 // pred_fallthru
        _
      // Predicated region
      $region37: #{block_forward.1} parent=11 // pred_check
        %p246 = pneg %p187
      $region38: #{block_forward.1} parent=11 // pred_check_branch
        %248 = sbr.rel (%p246) target = $region40
      $region39: #{block_forward.1} parent=11 // pred_region
        _
      $region40: #{block_forward.1} parent=11 // pred_fallthru
        _
    $region12: #{block_forward.1} parent=5 // pred_fallthru
      _
    %p249 = scmp.lt.s32.totalorder %s14, 2
    // Predicated region
    $region41: #{block_forward.1} parent=5 // pred_check
      %p250 = pneg %p249
    $region42: #{block_forward.1} parent=5 // pred_check_branch
      %252 = sbr.rel (%p250) target = $region44
    $region43: #{block_forward.1} parent=5 // pred_region
      // Predicated region
      $region45: #{block_forward.1} parent=43 // pred_check
        %p253 = pneg %p34
      $region46: #{block_forward.1} parent=43 // pred_check_branch
        %255 = sbr.rel (%p253) target = $region48
      $region47: #{block_forward.1} parent=43 // pred_region
        %s256 = smul.u32 4, %s14
        %p257 = scmp.lt.s32.totalorder %s256, 7
        %s258 = scalar_select %p257, %s256, 7
        %s259 = smul.addr %s258, 8
        %s260 = scalar_lea.vmem %s0, %s259
        %s261 = smul.u32 4, %s14
      $region48: #{block_forward.1} parent=43 // pred_fallthru
        _
    $region44: #{block_forward.1} parent=5 // pred_fallthru
      _
    %p262 = scmp.le.s32.totalorder 1, %s14
    %p263 = scmp.lt.s32.totalorder %s14, 3
    %p264 = pnand %p262, %p263
    %p265 = pneg %p264
    // Predicated region
    $region49: #{block_forward.1} parent=5 // pred_check
      _
    $region50: #{block_forward.1} parent=5 // pred_check_branch
      %267 = sbr.rel (%p264) target = $region52
    $region51: #{block_forward.1} parent=5 // pred_region
      %s268 = ssub.s32 %s14, 1
      %s269 = smul.u32 4, %s19
      %p270 = scmp.lt.s32.totalorder %s269, 7
      %s271 = scalar_select %p270, %s269, 7
      %s272 = smul.addr %s271, 8
      %s273 = scalar_lea.vmem %s0, %s272
      %p274 = pneg %p40
      %p275 = pneg %p37
      %p276 = pneg %p61
      %p277 = pneg %p58
      %p278 = pneg %p82
      %p279 = pneg %p79
      %p280 = pneg %p103
      %p281 = pneg %p100
      %p282 = pneg %p124
      %p283 = pneg %p121
      %p284 = pneg %p145
      %p285 = pneg %p142
      %p286 = pneg %p166
      %p287 = pneg %p163
      %p288 = pneg %p187
      %p289 = pneg %p184
      %p290 = pneg %p213
      %p291 = pneg %p210
      %s292 = smul.u32 4, %s19
      %p293 = scmp.lt.s32.totalorder %s292, 7
      %s294 = scalar_select %p293, %s292, 7
      %s295 = smul.addr %s294, 8
      %s296 = scalar_lea.vmem %s8, %s295
      %s297 = smul.u32 4, %s19
      %p298 = scmp.lt.s32.totalorder %s297, 7
      %s299 = scalar_select %p298, %s297, 7
      %s300 = smul.addr %s299, 8
      %s301 = scalar_lea.vmem %s0, %s300
      %s302 = smul.u32 4, %s19
      %s303 = smul.u32 4, %s19
      %p304 = scmp.lt.s32.totalorder %s303, 7
      %s305 = scalar_select %p304, %s303, 7
      %s306 = smul.addr %s305, 8
      %s307 = scalar_lea.vmem %s8, %s306
      %s308 = smul.u32 4, %s19
      %v310 = vld [vmem:[%s301] sm:$0xff]
      %v311 = vld [vmem:[%s301 + $0x8] sm:$0xff]
      %v312 = vld [vmem:[%s301 + $0x10] sm:$0xff]
      %v313 = vld [vmem:[%s301 + $0x18] sm:$0xff]
      %v314 = vld [vmem:[%s1] sm:$0x1]
      %v316 = vlaneseq
      %v317 = vshrl.u32 %v316, 7
      %v318 = vsub.s32 0, %v317
      %v319 = vrot.slane %v314, %v318
      %v321 = vadd.f32 %v310, %v319
      %v322 = vadd.f32 %v311, %v319
      %v323 = vadd.f32 %v312, %v319
      %v324 = vadd.f32 %v313, %v319
      %v325 = vld [vmem:[%s2] sm:$0x1]
      %v326 = vld [vmem:[%s3] sm:$0x1]
      %327 = vadd.xlane.f32.xlu0 %v321
      %v328 = vpop.xlane.xlu0 %327
      %329 = vadd.xlane.f32.xlu0 %v322
      %v330 = vpop.xlane.xlu0 %329
      %331 = vadd.xlane.f32.xlu0 %v323
      %v332 = vpop.xlane.xlu0 %331
      %333 = vadd.xlane.f32.xlu0 %v324
      %v334 = vpop.xlane.xlu0 %333
      %v335 = vrcp.pop 128.0
      %v336 = vmul.f32 %v328, %v335
      %v337 = vmul.f32 %v330, %v335
      %v338 = vmul.f32 %v332, %v335
      %v339 = vmul.f32 %v334, %v335
      %v340 = vsub.f32 %v321, %v336
      %v341 = vsub.f32 %v322, %v337
      %v342 = vsub.f32 %v323, %v338
      %v343 = vsub.f32 %v324, %v339
      %v344 = vmul.f32 %v340, %v340
      %v345 = vmul.f32 %v341, %v341
      %v346 = vmul.f32 %v342, %v342
      %v347 = vmul.f32 %v343, %v343
      %348 = vadd.xlane.f32.xlu0 %v344
      %v349 = vpop.xlane.xlu0 %348
      %350 = vadd.xlane.f32.xlu0 %v345
      %v351 = vpop.xlane.xlu0 %350
      %352 = vadd.xlane.f32.xlu0 %v346
      %v353 = vpop.xlane.xlu0 %352
      %354 = vadd.xlane.f32.xlu0 %v347
      %v355 = vpop.xlane.xlu0 %354
      %v356 = vmul.f32 %v349, %v335
      %v357 = vmul.f32 %v351, %v335
      %v358 = vmul.f32 %v353, %v335
      %v359 = vmul.f32 %v355, %v335
      %v360 = vadd.f32 %v356, 1e-05
      %v361 = vadd.f32 %v357, 1e-05
      %v362 = vadd.f32 %v358, 1e-05
      %v363 = vadd.f32 %v359, 1e-05
      %v364 = vrsqrt.pop %v360
      %v365 = vrsqrt.pop %v361
      %v366 = vrsqrt.pop %v362
      %v367 = vrsqrt.pop %v363
      %v368 = vmul.f32 %v340, %v364
      %v369 = vmul.f32 %v341, %v365
      %v370 = vmul.f32 %v342, %v366
      %v371 = vmul.f32 %v343, %v367
      %v373 = vlaneseq
      %v374 = vshrl.u32 %v373, 7
      %v375 = vsub.s32 0, %v374
      %v376 = vrot.slane %v325, %v375
      %v378 = vmul.f32 %v368, %v376
      %v379 = vmul.f32 %v369, %v376
      %v380 = vmul.f32 %v370, %v376
      %v381 = vmul.f32 %v371, %v376
      %v383 = vlaneseq
      %v384 = vshrl.u32 %v383, 7
      %v385 = vsub.s32 0, %v384
      %v386 = vrot.slane %v326, %v385
      %v388 = vadd.f32 %v378, %v386
      %v389 = vadd.f32 %v379, %v386
      %v390 = vadd.f32 %v380, %v386
      %v391 = vadd.f32 %v381, %v386
      %v392 = vpack.c.bf16 %v389, %v388
      %v393 = vpack.c.bf16 %v391, %v390
      %v394 = vld [vmem:[%s4] sm:$0xff]
      %v395 = vld [vmem:[%s4 + $0x8] sm:$0xff]
      %v396 = vld [vmem:[%s4 + $0x10] sm:$0xff]
      %v397 = vld [vmem:[%s4 + $0x18] sm:$0xff]
      %v398 = vld [vmem:[%s4 + $0x20] sm:$0xff]
      %v399 = vld [vmem:[%s4 + $0x28] sm:$0xff]
      %v400 = vld [vmem:[%s4 + $0x30] sm:$0xff]
      %v401 = vld [vmem:[%s4 + $0x38] sm:$0xff]
      %v402 = vld [vmem:[%s4 + $0x40] sm:$0xff]
      %v403 = vld [vmem:[%s4 + $0x48] sm:$0xff]
      %v404 = vld [vmem:[%s4 + $0x50] sm:$0xff]
      %v405 = vld [vmem:[%s4 + $0x58] sm:$0xff]
      %v406 = vld [vmem:[%s4 + $0x60] sm:$0xff]
      %v407 = vld [vmem:[%s4 + $0x68] sm:$0xff]
      %v408 = vld [vmem:[%s4 + $0x70] sm:$0xff]
      %v409 = vld [vmem:[%s4 + $0x78] sm:$0xff]
      %v410 = vld [vmem:[%s4 + $0x80] sm:$0xff]
      %v411 = vld [vmem:[%s4 + $0x88] sm:$0xff]
      %v412 = vld [vmem:[%s4 + $0x90] sm:$0xff]
      %v413 = vld [vmem:[%s4 + $0x98] sm:$0xff]
      %v414 = vld [vmem:[%s4 + $0xa0] sm:$0xff]
      %v415 = vld [vmem:[%s4 + $0xa8] sm:$0xff]
      %v416 = vld [vmem:[%s4 + $0xb0] sm:$0xff]
      %v417 = vld [vmem:[%s4 + $0xb8] sm:$0xff]
      %v418 = vld [vmem:[%s4 + $0xc0] sm:$0xff]
      %v419 = vld [vmem:[%s4 + $0xc8] sm:$0xff]
      %v420 = vld [vmem:[%s4 + $0xd0] sm:$0xff]
      %v421 = vld [vmem:[%s4 + $0xd8] sm:$0xff]
      %v422 = vld [vmem:[%s4 + $0xe0] sm:$0xff]
      %v423 = vld [vmem:[%s4 + $0xe8] sm:$0xff]
      %v424 = vld [vmem:[%s4 + $0xf0] sm:$0xff]
      %v425 = vld [vmem:[%s4 + $0xf8] sm:$0xff]
      %v426 = vld [vmem:[%s5] sm:$0xf]
      %v428 = vlaneseq
      %v429 = vshrl.u32 %v428, 7
      %v430 = vsub.s32 0, %v429
      %v431 = vrot.slane %v426, %v430
      %v432 = vlaneseq
      %v433 = vshrl.u32 %v432, 7
      %v434 = vsub.s32 1, %v433
      %v435 = vrot.slane %v426, %v434
      %v436 = vlaneseq
      %v437 = vshrl.u32 %v436, 7
      %v438 = vsub.s32 2, %v437
      %v439 = vrot.slane %v426, %v438
      %v440 = vlaneseq
      %v441 = vshrl.u32 %v440, 7
      %v442 = vsub.s32 3, %v441
      %v443 = vrot.slane %v426, %v442
      %v480 = vunpack.c.l.b16 %v394
      %v481 = vunpack.c.h.b16 %v394
      %v482 = vunpack.c.l.b16 %v395
      %v483 = vunpack.c.h.b16 %v395
      %v484 = vunpack.c.l.b16 %v396
      %v485 = vunpack.c.h.b16 %v396
      %v486 = vunpack.c.l.b16 %v397
      %v487 = vunpack.c.h.b16 %v397
      %v488 = vunpack.c.l.b16 %v398
      %v489 = vunpack.c.h.b16 %v398
      %v490 = vunpack.c.l.b16 %v399
      %v491 = vunpack.c.h.b16 %v399
      %v492 = vunpack.c.l.b16 %v400
      %v493 = vunpack.c.h.b16 %v400
      %v494 = vunpack.c.l.b16 %v401
      %v495 = vunpack.c.h.b16 %v401
      %v496 = vunpack.c.l.b16 %v402
      %v497 = vunpack.c.h.b16 %v402
      %v498 = vunpack.c.l.b16 %v403
      %v499 = vunpack.c.h.b16 %v403
      %v500 = vunpack.c.l.b16 %v404
      %v501 = vunpack.c.h.b16 %v404
      %v502 = vunpack.c.l.b16 %v405
      %v503 = vunpack.c.h.b16 %v405
      %v504 = vunpack.c.l.b16 %v406
      %v505 = vunpack.c.h.b16 %v406
      %v506 = vunpack.c.l.b16 %v407
      %v507 = vunpack.c.h.b16 %v407
      %v508 = vunpack.c.l.b16 %v408
      %v509 = vunpack.c.h.b16 %v408
      %v510 = vunpack.c.l.b16 %v409
      %v511 = vunpack.c.h.b16 %v409
      %v512 = vunpack.c.l.b16 %v410
      %v513 = vunpack.c.h.b16 %v410
      %v514 = vunpack.c.l.b16 %v411
      %v515 = vunpack.c.h.b16 %v411
      %v516 = vunpack.c.l.b16 %v412
      %v517 = vunpack.c.h.b16 %v412
      %v518 = vunpack.c.l.b16 %v413
      %v519 = vunpack.c.h.b16 %v413
      %v520 = vunpack.c.l.b16 %v414
      %v521 = vunpack.c.h.b16 %v414
      %v522 = vunpack.c.l.b16 %v415
      %v523 = vunpack.c.h.b16 %v415
      %v524 = vunpack.c.l.b16 %v416
      %v525 = vunpack.c.h.b16 %v416
      %v526 = vunpack.c.l.b16 %v417
      %v527 = vunpack.c.h.b16 %v417
      %v528 = vunpack.c.l.b16 %v418
      %v529 = vunpack.c.h.b16 %v418
      %v530 = vunpack.c.l.b16 %v419
      %v531 = vunpack.c.h.b16 %v419
      %v532 = vunpack.c.l.b16 %v420
      %v533 = vunpack.c.h.b16 %v420
      %v534 = vunpack.c.l.b16 %v421
      %v535 = vunpack.c.h.b16 %v421
      %v536 = vunpack.c.l.b16 %v422
      %v537 = vunpack.c.h.b16 %v422
      %v538 = vunpack.c.l.b16 %v423
      %v539 = vunpack.c.h.b16 %v423
      %v540 = vunpack.c.l.b16 %v424
      %v541 = vunpack.c.h.b16 %v424
      %v542 = vunpack.c.l.b16 %v425
      %v543 = vunpack.c.h.b16 %v425
      %v544 = vpack.c.b16 %v484, %v480
      %v545 = vpack.c.b16 %v485, %v481
      %v546 = vpack.c.b16 %v486, %v482
      %v547 = vpack.c.b16 %v487, %v483
      %v548 = vpack.c.b16 %v492, %v488
      %v549 = vpack.c.b16 %v493, %v489
      %v550 = vpack.c.b16 %v494, %v490
      %v551 = vpack.c.b16 %v495, %v491
      %v552 = vpack.c.b16 %v500, %v496
      %v553 = vpack.c.b16 %v501, %v497
      %v554 = vpack.c.b16 %v502, %v498
      %v555 = vpack.c.b16 %v503, %v499
      %v556 = vpack.c.b16 %v508, %v504
      %v557 = vpack.c.b16 %v509, %v505
      %v558 = vpack.c.b16 %v510, %v506
      %v559 = vpack.c.b16 %v511, %v507
      %v560 = vpack.c.b16 %v516, %v512
      %v561 = vpack.c.b16 %v517, %v513
      %v562 = vpack.c.b16 %v518, %v514
      %v563 = vpack.c.b16 %v519, %v515
      %v564 = vpack.c.b16 %v524, %v520
      %v565 = vpack.c.b16 %v525, %v521
      %v566 = vpack.c.b16 %v526, %v522
      %v567 = vpack.c.b16 %v527, %v523
      %v568 = vpack.c.b16 %v532, %v528
      %v569 = vpack.c.b16 %v533, %v529
      %v570 = vpack.c.b16 %v534, %v530
      %v571 = vpack.c.b16 %v535, %v531
      %v572 = vpack.c.b16 %v540, %v536
      %v573 = vpack.c.b16 %v541, %v537
      %v574 = vpack.c.b16 %v542, %v538
      %v575 = vpack.c.b16 %v543, %v539
      %608 = vmatprep.subr.bf16.mxu0 %v545
      %609 = vmatpush1.bf16.msra.mxu0 %v544
      %610 = vmatprep.subr.bf16.mxu0 %v549
      %611 = vmatpush1.bf16.msra.mxu0 %v548
      %612 = vmatprep.subr.bf16.mxu0 %v553
      %613 = vmatpush1.bf16.msra.mxu0 %v552
      %614 = vmatprep.subr.bf16.mxu0 %v557
      %615 = vmatpush1.bf16.msra.mxu0 %v556
      %616 = vmatprep.subr.bf16.mxu0 %v561
      %617 = vmatpush1.bf16.msra.mxu0 %v560
      %618 = vmatprep.subr.bf16.mxu0 %v565
      %619 = vmatpush1.bf16.msra.mxu0 %v564
      %620 = vmatprep.subr.bf16.mxu0 %v569
      %621 = vmatpush1.bf16.msra.mxu0 %v568
      %622 = vmatprep.subr.bf16.mxu0 %v573
      %623 = vmatpush1.bf16.msra.mxu0 %v572
      %624 = vmatprep.subr.bf16.mxu0 0
      %625 = vmatpush1.bf16.msra.mxu0 0
      %626 = vmatprep.subr.bf16.mxu0 0
      %627 = vmatpush1.bf16.msra.mxu0 0
      %628 = vmatprep.subr.bf16.mxu0 0
      %629 = vmatpush1.bf16.msra.mxu0 0
      %630 = vmatprep.subr.bf16.mxu0 0
      %631 = vmatpush1.bf16.msra.mxu0 0
      %632 = vmatprep.subr.bf16.mxu0 0
      %633 = vmatpush1.bf16.msra.mxu0 0
      %634 = vmatprep.subr.bf16.mxu0 0
      %635 = vmatpush1.bf16.msra.mxu0 0
      %636 = vmatprep.subr.bf16.mxu0 0
      %637 = vmatpush1.bf16.msra.mxu0 0
      %638 = vmatprep.subr.bf16.mxu0 0
      %639 = vmatpush1.bf16.msra.mxu0 0
      %640 = vmatprep.mubr.bf16.mxu0 0
      %641 = vmatmul.mubr.bf16.gmra.mrb[0].mxu0 %v392
      %v642 = vpop.f32.mrb[0].mxu0
      %v643 = vadd.f32 %v431, %v642
      %v644 = vpop.f32.mrb[0].mxu0
      %v645 = vadd.f32 %v435, %v644
      %v646 = vpop.f32.mrb[0].mxu0
      %v647 = vadd.f32 %v431, %v646
      %v648 = vpop.f32.mrb[0].mxu0
      %v649 = vadd.f32 %v435, %v648
      %650 = vmatprep.mubr.bf16.mxu0 0
      %651 = vmatmul.mubr.bf16.gmra.mrb[0].mxu0 %v393
      %v652 = vpop.f32.mrb[0].mxu0
      %v653 = vadd.f32 %v431, %v652
      %v654 = vpop.f32.mrb[0].mxu0
      %v655 = vadd.f32 %v435, %v654
      %v656 = vpop.f32.mrb[0].mxu0
      %v657 = vadd.f32 %v431, %v656
      %v658 = vpop.f32.mrb[0].mxu0
      %v659 = vadd.f32 %v435, %v658
      %660 = vdwg.mxu0
      %661 = vmatprep.subr.bf16.mxu0 %v547
      %662 = vmatpush1.bf16.msra.mxu0 %v546
      %663 = vmatprep.subr.bf16.mxu0 %v551
      %664 = vmatpush1.bf16.msra.mxu0 %v550
      %665 = vmatprep.subr.bf16.mxu0 %v555
      %666 = vmatpush1.bf16.msra.mxu0 %v554
      %667 = vmatprep.subr.bf16.mxu0 %v559
      %668 = vmatpush1.bf16.msra.mxu0 %v558
      %669 = vmatprep.subr.bf16.mxu0 %v563
      %670 = vmatpush1.bf16.msra.mxu0 %v562
      %671 = vmatprep.subr.bf16.mxu0 %v567
      %672 = vmatpush1.bf16.msra.mxu0 %v566
      %673 = vmatprep.subr.bf16.mxu0 %v571
      %674 = vmatpush1.bf16.msra.mxu0 %v570
      %675 = vmatprep.subr.bf16.mxu0 %v575
      %676 = vmatpush1.bf16.msra.mxu0 %v574
      %677 = vmatprep.subr.bf16.mxu0 0
      %678 = vmatpush1.bf16.msra.mxu0 0
      %679 = vmatprep.subr.bf16.mxu0 0
      %680 = vmatpush1.bf16.msra.mxu0 0
      %681 = vmatprep.subr.bf16.mxu0 0
      %682 = vmatpush1.bf16.msra.mxu0 0
      %683 = vmatprep.subr.bf16.mxu0 0
      %684 = vmatpush1.bf16.msra.mxu0 0
      %685 = vmatprep.subr.bf16.mxu0 0
      %686 = vmatpush1.bf16.msra.mxu0 0
      %687 = vmatprep.subr.bf16.mxu0 0
      %688 = vmatpush1.bf16.msra.mxu0 0
      %689 = vmatprep.subr.bf16.mxu0 0
      %690 = vmatpush1.bf16.msra.mxu0 0
      %691 = vmatprep.subr.bf16.mxu0 0
      %692 = vmatpush1.bf16.msra.mxu0 0
      %693 = vmatprep.mubr.bf16.mxu0 0
      %694 = vmatmul.mubr.bf16.gmra.mrb[0].mxu0 %v392
      %v695 = vpop.f32.mrb[0].mxu0
      %v696 = vadd.f32 %v439, %v695
      %v697 = vpop.f32.mrb[0].mxu0
      %v698 = vadd.f32 %v443, %v697
      %v699 = vpop.f32.mrb[0].mxu0
      %v700 = vadd.f32 %v439, %v699
      %v701 = vpop.f32.mrb[0].mxu0
      %v702 = vadd.f32 %v443, %v701
      %703 = vmatprep.mubr.bf16.mxu0 0
      %704 = vmatmul.mubr.bf16.gmra.mrb[0].mxu0 %v393
      %v705 = vpop.f32.mrb[0].mxu0
      %v706 = vadd.f32 %v439, %v705
      %v707 = vpop.f32.mrb[0].mxu0
      %v708 = vadd.f32 %v443, %v707
      %v709 = vpop.f32.mrb[0].mxu0
      %v710 = vadd.f32 %v439, %v709
      %v711 = vpop.f32.mrb[0].mxu0
      %v712 = vadd.f32 %v443, %v711
      %713 = vdwg.mxu0
      %v714 = vmax.f32 %v643, 0.0
      %v715 = vmax.f32 %v645, 0.0
      %v716 = vmax.f32 %v696, 0.0
      %v717 = vmax.f32 %v698, 0.0
      %v718 = vmax.f32 %v647, 0.0
      %v719 = vmax.f32 %v649, 0.0
      %v720 = vmax.f32 %v700, 0.0
      %v721 = vmax.f32 %v702, 0.0
      %v722 = vmax.f32 %v653, 0.0
      %v723 = vmax.f32 %v655, 0.0
      %v724 = vmax.f32 %v706, 0.0
      %v725 = vmax.f32 %v708, 0.0
      %v726 = vmax.f32 %v657, 0.0
      %v727 = vmax.f32 %v659, 0.0
      %v728 = vmax.f32 %v710, 0.0
      %v729 = vmax.f32 %v712, 0.0
      %v730 = vpack.c.bf16 %v718, %v714
      %v731 = vpack.c.bf16 %v719, %v715
      %v732 = vpack.c.bf16 %v720, %v716
      %v733 = vpack.c.bf16 %v721, %v717
      %v734 = vpack.c.bf16 %v726, %v722
      %v735 = vpack.c.bf16 %v727, %v723
      %v736 = vpack.c.bf16 %v728, %v724
      %v737 = vpack.c.bf16 %v729, %v725
      %v738 = vld [vmem:[%s6] sm:$0xf]
      %v739 = vld [vmem:[%s6 + $0x4] sm:$0xf]
      %v740 = vld [vmem:[%s6 + $0x8] sm:$0xf]
      %v741 = vld [vmem:[%s6 + $0xc] sm:$0xf]
      %v742 = vld [vmem:[%s6 + $0x10] sm:$0xf]
      %v743 = vld [vmem:[%s6 + $0x14] sm:$0xf]
      %v744 = vld [vmem:[%s6 + $0x18] sm:$0xf]
      %v745 = vld [vmem:[%s6 + $0x1c] sm:$0xf]
      %v746 = vld [vmem:[%s6 + $0x20] sm:$0xf]
      %v747 = vld [vmem:[%s6 + $0x24] sm:$0xf]
      %v748 = vld [vmem:[%s6 + $0x28] sm:$0xf]
      %v749 = vld [vmem:[%s6 + $0x2c] sm:$0xf]
      %v750 = vld [vmem:[%s6 + $0x30] sm:$0xf]
      %v751 = vld [vmem:[%s6 + $0x34] sm:$0xf]
      %v752 = vld [vmem:[%s6 + $0x38] sm:$0xf]
      %v753 = vld [vmem:[%s6 + $0x3c] sm:$0xf]
      %v754 = vld [vmem:[%s6 + $0x40] sm:$0xf]
      %v755 = vld [vmem:[%s6 + $0x44] sm:$0xf]
      %v756 = vld [vmem:[%s6 + $0x48] sm:$0xf]
      %v757 = vld [vmem:[%s6 + $0x4c] sm:$0xf]
      %v758 = vld [vmem:[%s6 + $0x50] sm:$0xf]
      %v759 = vld [vmem:[%s6 + $0x54] sm:$0xf]
      %v760 = vld [vmem:[%s6 + $0x58] sm:$0xf]
      %v761 = vld [vmem:[%s6 + $0x5c] sm:$0xf]
      %v762 = vld [vmem:[%s6 + $0x60] sm:$0xf]
      %v763 = vld [vmem:[%s6 + $0x64] sm:$0xf]
      %v764 = vld [vmem:[%s6 + $0x68] sm:$0xf]
      %v765 = vld [vmem:[%s6 + $0x6c] sm:$0xf]
      %v766 = vld [vmem:[%s6 + $0x70] sm:$0xf]
      %v767 = vld [vmem:[%s6 + $0x74] sm:$0xf]
      %v768 = vld [vmem:[%s6 + $0x78] sm:$0xf]
      %v769 = vld [vmem:[%s6 + $0x7c] sm:$0xf]
      %v770 = vld [vmem:[%s6 + $0x80] sm:$0xf]
      %v771 = vld [vmem:[%s6 + $0x84] sm:$0xf]
      %v772 = vld [vmem:[%s6 + $0x88] sm:$0xf]
      %v773 = vld [vmem:[%s6 + $0x8c] sm:$0xf]
      %v774 = vld [vmem:[%s6 + $0x90] sm:$0xf]
      %v775 = vld [vmem:[%s6 + $0x94] sm:$0xf]
      %v776 = vld [vmem:[%s6 + $0x98] sm:$0xf]
      %v777 = vld [vmem:[%s6 + $0x9c] sm:$0xf]
      %v778 = vld [vmem:[%s6 + $0xa0] sm:$0xf]
      %v779 = vld [vmem:[%s6 + $0xa4] sm:$0xf]
      %v780 = vld [vmem:[%s6 + $0xa8] sm:$0xf]
      %v781 = vld [vmem:[%s6 + $0xac] sm:$0xf]
      %v782 = vld [vmem:[%s6 + $0xb0] sm:$0xf]
      %v783 = vld [vmem:[%s6 + $0xb4] sm:$0xf]
      %v784 = vld [vmem:[%s6 + $0xb8] sm:$0xf]
      %v785 = vld [vmem:[%s6 + $0xbc] sm:$0xf]
      %v786 = vld [vmem:[%s6 + $0xc0] sm:$0xf]
      %v787 = vld [vmem:[%s6 + $0xc4] sm:$0xf]
      %v788 = vld [vmem:[%s6 + $0xc8] sm:$0xf]
      %v789 = vld [vmem:[%s6 + $0xcc] sm:$0xf]
      %v790 = vld [vmem:[%s6 + $0xd0] sm:$0xf]
      %v791 = vld [vmem:[%s6 + $0xd4] sm:$0xf]
      %v792 = vld [vmem:[%s6 + $0xd8] sm:$0xf]
      %v793 = vld [vmem:[%s6 + $0xdc] sm:$0xf]
      %v794 = vld [vmem:[%s6 + $0xe0] sm:$0xf]
      %v795 = vld [vmem:[%s6 + $0xe4] sm:$0xf]
      %v796 = vld [vmem:[%s6 + $0xe8] sm:$0xf]
      %v797 = vld [vmem:[%s6 + $0xec] sm:$0xf]
      %v798 = vld [vmem:[%s6 + $0xf0] sm:$0xf]
      %v799 = vld [vmem:[%s6 + $0xf4] sm:$0xf]
      %v800 = vld [vmem:[%s6 + $0xf8] sm:$0xf]
      %v801 = vld [vmem:[%s6 + $0xfc] sm:$0xf]
      %v802 = vld [vmem:[%s7] sm:$0x1]
      %v804 = vlaneseq
      %v805 = vshrl.u32 %v804, 7
      %v806 = vsub.s32 0, %v805
      %v807 = vrot.slane %v802, %v806
      %v873 = vunpack.c.l.b16 %v738
      %v874 = vunpack.c.l.b16 %v739
      %v875 = vunpack.c.l.b16 %v740
      %v876 = vunpack.c.l.b16 %v741
      %v877 = vunpack.c.l.b16 %v742
      %v878 = vunpack.c.l.b16 %v743
      %v879 = vunpack.c.l.b16 %v744
      %v880 = vunpack.c.l.b16 %v745
      %v881 = vunpack.c.l.b16 %v746
      %v882 = vunpack.c.l.b16 %v747
      %v883 = vunpack.c.l.b16 %v748
      %v884 = vunpack.c.l.b16 %v749
      %v885 = vunpack.c.l.b16 %v750
      %v886 = vunpack.c.l.b16 %v751
      %v887 = vunpack.c.l.b16 %v752
      %v888 = vunpack.c.l.b16 %v753
      %v889 = vunpack.c.l.b16 %v754
      %v890 = vunpack.c.l.b16 %v755
      %v891 = vunpack.c.l.b16 %v756
      %v892 = vunpack.c.l.b16 %v757
      %v893 = vunpack.c.l.b16 %v758
      %v894 = vunpack.c.l.b16 %v759
      %v895 = vunpack.c.l.b16 %v760
      %v896 = vunpack.c.l.b16 %v761
      %v897 = vunpack.c.l.b16 %v762
      %v898 = vunpack.c.l.b16 %v763
      %v899 = vunpack.c.l.b16 %v764
      %v900 = vunpack.c.l.b16 %v765
      %v901 = vunpack.c.l.b16 %v766
      %v902 = vunpack.c.l.b16 %v767
      %v903 = vunpack.c.l.b16 %v768
      %v904 = vunpack.c.l.b16 %v769
      %v905 = vunpack.c.l.b16 %v770
      %v906 = vunpack.c.l.b16 %v771
      %v907 = vunpack.c.l.b16 %v772
      %v908 = vunpack.c.l.b16 %v773
      %v909 = vunpack.c.l.b16 %v774
      %v910 = vunpack.c.l.b16 %v775
      %v911 = vunpack.c.l.b16 %v776
      %v912 = vunpack.c.l.b16 %v777
      %v913 = vunpack.c.l.b16 %v778
      %v914 = vunpack.c.l.b16 %v779
      %v915 = vunpack.c.l.b16 %v780
      %v916 = vunpack.c.l.b16 %v781
      %v917 = vunpack.c.l.b16 %v782
      %v918 = vunpack.c.l.b16 %v783
      %v919 = vunpack.c.l.b16 %v784
      %v920 = vunpack.c.l.b16 %v785
      %v921 = vunpack.c.l.b16 %v786
      %v922 = vunpack.c.l.b16 %v787
      %v923 = vunpack.c.l.b16 %v788
      %v924 = vunpack.c.l.b16 %v789
      %v925 = vunpack.c.l.b16 %v790
      %v926 = vunpack.c.l.b16 %v791
      %v927 = vunpack.c.l.b16 %v792
      %v928 = vunpack.c.l.b16 %v793
      %v929 = vunpack.c.l.b16 %v794
      %v930 = vunpack.c.l.b16 %v795
      %v931 = vunpack.c.l.b16 %v796
      %v932 = vunpack.c.l.b16 %v797
      %v933 = vunpack.c.l.b16 %v798
      %v934 = vunpack.c.l.b16 %v799
      %v935 = vunpack.c.l.b16 %v800
      %v936 = vunpack.c.l.b16 %v801
      %v937 = vpack.c.b16 %v874, %v873
      %v938 = vpack.c.b16 %v876, %v875
      %v939 = vpack.c.b16 %v878, %v877
      %v940 = vpack.c.b16 %v880, %v879
      %v941 = vpack.c.b16 %v882, %v881
      %v942 = vpack.c.b16 %v884, %v883
      %v943 = vpack.c.b16 %v886, %v885
      %v944 = vpack.c.b16 %v888, %v887
      %v945 = vpack.c.b16 %v890, %v889
      %v946 = vpack.c.b16 %v892, %v891
      %v947 = vpack.c.b16 %v894, %v893
      %v948 = vpack.c.b16 %v896, %v895
      %v949 = vpack.c.b16 %v898, %v897
      %v950 = vpack.c.b16 %v900, %v899
      %v951 = vpack.c.b16 %v902, %v901
      %v952 = vpack.c.b16 %v904, %v903
      %v953 = vpack.c.b16 %v906, %v905
      %v954 = vpack.c.b16 %v908, %v907
      %v955 = vpack.c.b16 %v910, %v909
      %v956 = vpack.c.b16 %v912, %v911
      %v957 = vpack.c.b16 %v914, %v913
      %v958 = vpack.c.b16 %v916, %v915
      %v959 = vpack.c.b16 %v918, %v917
      %v960 = vpack.c.b16 %v920, %v919
      %v961 = vpack.c.b16 %v922, %v921
      %v962 = vpack.c.b16 %v924, %v923
      %v963 = vpack.c.b16 %v926, %v925
      %v964 = vpack.c.b16 %v928, %v927
      %v965 = vpack.c.b16 %v930, %v929
      %v966 = vpack.c.b16 %v932, %v931
      %v967 = vpack.c.b16 %v934, %v933
      %v968 = vpack.c.b16 %v936, %v935
      %1001 = vmatprep.subr.bf16.mxu0 0
      %1002 = vmatpush1.bf16.msra.mxu0 %v937
      %1003 = vmatprep.subr.bf16.mxu0 0
      %1004 = vmatpush1.bf16.msra.mxu0 %v938
      %1005 = vmatprep.subr.bf16.mxu0 0
      %1006 = vmatpush1.bf16.msra.mxu0 %v939
      %1007 = vmatprep.subr.bf16.mxu0 0
      %1008 = vmatpush1.bf16.msra.mxu0 %v940
      %1009 = vmatprep.subr.bf16.mxu0 0
      %1010 = vmatpush1.bf16.msra.mxu0 %v941
      %1011 = vmatprep.subr.bf16.mxu0 0
      %1012 = vmatpush1.bf16.msra.mxu0 %v942
      %1013 = vmatprep.subr.bf16.mxu0 0
      %1014 = vmatpush1.bf16.msra.mxu0 %v943
      %1015 = vmatprep.subr.bf16.mxu0 0
      %1016 = vmatpush1.bf16.msra.mxu0 %v944
      %1017 = vmatprep.subr.bf16.mxu0 0
      %1018 = vmatpush1.bf16.msra.mxu0 %v945
      %1019 = vmatprep.subr.bf16.mxu0 0
      %1020 = vmatpush1.bf16.msra.mxu0 %v946
      %1021 = vmatprep.subr.bf16.mxu0 0
      %1022 = vmatpush1.bf16.msra.mxu0 %v947
      %1023 = vmatprep.subr.bf16.mxu0 0
      %1024 = vmatpush1.bf16.msra.mxu0 %v948
      %1025 = vmatprep.subr.bf16.mxu0 0
      %1026 = vmatpush1.bf16.msra.mxu0 %v949
      %1027 = vmatprep.subr.bf16.mxu0 0
      %1028 = vmatpush1.bf16.msra.mxu0 %v950
      %1029 = vmatprep.subr.bf16.mxu0 0
      %1030 = vmatpush1.bf16.msra.mxu0 %v951
      %1031 = vmatprep.subr.bf16.mxu0 0
      %1032 = vmatpush1.bf16.msra.mxu0 %v952
      %1033 = vmatprep.mubr.bf16.mxu0 %v731
      %1034 = vmatmul.mubr.bf16.gmra.mrb[0].mxu0 %v730
      %v1035 = vpop.f32.mrb[0].mxu0
      %v1036 = vadd.f32 %v807, %v1035
      %v1037 = vpop.f32.mrb[0].mxu0
      %v1038 = vpop.f32.mrb[0].mxu0
      %v1039 = vadd.f32 %v807, %v1038
      %v1040 = vpop.f32.mrb[0].mxu0
      %1041 = vmatprep.mubr.bf16.mxu0 %v735
      %1042 = vmatmul.mubr.bf16.gmra.mrb[0].mxu0 %v734
      %v1043 = vpop.f32.mrb[0].mxu0
      %v1044 = vadd.f32 %v807, %v1043
      %v1045 = vpop.f32.mrb[0].mxu0
      %v1046 = vpop.f32.mrb[0].mxu0
      %v1047 = vadd.f32 %v807, %v1046
      %v1048 = vpop.f32.mrb[0].mxu0
      %1049 = vdwg.mxu0
      %1050 = vmatprep.subr.bf16.mxu0 0
      %1051 = vmatpush1.bf16.msra.mxu0 %v953
      %1052 = vmatprep.subr.bf16.mxu0 0
      %1053 = vmatpush1.bf16.msra.mxu0 %v954
      %1054 = vmatprep.subr.bf16.mxu0 0
      %1055 = vmatpush1.bf16.msra.mxu0 %v955
      %1056 = vmatprep.subr.bf16.mxu0 0
      %1057 = vmatpush1.bf16.msra.mxu0 %v956
      %1058 = vmatprep.subr.bf16.mxu0 0
      %1059 = vmatpush1.bf16.msra.mxu0 %v957
      %1060 = vmatprep.subr.bf16.mxu0 0
      %1061 = vmatpush1.bf16.msra.mxu0 %v958
      %1062 = vmatprep.subr.bf16.mxu0 0
      %1063 = vmatpush1.bf16.msra.mxu0 %v959
      %1064 = vmatprep.subr.bf16.mxu0 0
      %1065 = vmatpush1.bf16.msra.mxu0 %v960
      %1066 = vmatprep.subr.bf16.mxu0 0
      %1067 = vmatpush1.bf16.msra.mxu0 %v961
      %1068 = vmatprep.subr.bf16.mxu0 0
      %1069 = vmatpush1.bf16.msra.mxu0 %v962
      %1070 = vmatprep.subr.bf16.mxu0 0
      %1071 = vmatpush1.bf16.msra.mxu0 %v963
      %1072 = vmatprep.subr.bf16.mxu0 0
      %1073 = vmatpush1.bf16.msra.mxu0 %v964
      %1074 = vmatprep.subr.bf16.mxu0 0
      %1075 = vmatpush1.bf16.msra.mxu0 %v965
      %1076 = vmatprep.subr.bf16.mxu0 0
      %1077 = vmatpush1.bf16.msra.mxu0 %v966
      %1078 = vmatprep.subr.bf16.mxu0 0
      %1079 = vmatpush1.bf16.msra.mxu0 %v967
      %1080 = vmatprep.subr.bf16.mxu0 0
      %1081 = vmatpush1.bf16.msra.mxu0 %v968
      %1082 = vmatprep.mubr.bf16.mxu0 %v733
      %1083 = vmatmul.mubr.bf16.gmra.mrb[0].mxu0 %v732
      %v1084 = vpop.f32.mrb[0].mxu0
      %v1085 = vadd.f32 %v1036, %v1084
      %v1086 = vpop.f32.mrb[0].mxu0
      %v1087 = vpop.f32.mrb[0].mxu0
      %v1088 = vadd.f32 %v1039, %v1087
      %v1089 = vpop.f32.mrb[0].mxu0
      %1090 = vmatprep.mubr.bf16.mxu0 %v737
      %1091 = vmatmul.mubr.bf16.gmra.mrb[0].mxu0 %v736
      %v1092 = vpop.f32.mrb[0].mxu0
      %v1093 = vadd.f32 %v1044, %v1092
      %v1094 = vpop.f32.mrb[0].mxu0
      %v1095 = vpop.f32.mrb[0].mxu0
      %v1096 = vadd.f32 %v1047, %v1095
      %v1097 = vpop.f32.mrb[0].mxu0
      %1098 = vdwg.mxu0
      %v1099 = vadd.f32 %v321, %v1085
      %v1100 = vadd.f32 %v322, %v1088
      %v1101 = vadd.f32 %v323, %v1093
      %v1102 = vadd.f32 %v324, %v1096
      %1103 = vst [vmem:[%s307] sm:$0xff] %v1099
      %1104 = vst [vmem:[%s307 + $0x8] sm:$0xff] %v1100
      %1105 = vst [vmem:[%s307 + $0x10] sm:$0xff] %v1101
      %1106 = vst [vmem:[%s307 + $0x18] sm:$0xff] %v1102
      %s1107 = smul.u32 4, %s19
      %p1108 = scmp.lt.s32.totalorder %s1107, 7
      %s1109 = scalar_select %p1108, %s1107, 7
      %s1110 = smul.addr %s1109, 8
      %s1111 = scalar_lea.vmem %s8, %s1110
      // Predicated region
      $region53: #{block_forward.1} parent=51 // pred_check
        %p1112 = pneg %p210
      $region54: #{block_forward.1} parent=51 // pred_check_branch
        %1114 = sbr.rel (%p1112) target = $region56
      $region55: #{block_forward.1} parent=51 // pred_region
        %s1115 = smul.u32 4, %s19
      $region56: #{block_forward.1} parent=51 // pred_fallthru
        _
    $region52: #{block_forward.1} parent=5 // pred_fallthru
      _
    %p1116 = scmp.le.s32.totalorder 2, %s14
    // Predicated region
    $region57: #{block_forward.1} parent=5 // pred_check
      %p1117 = pneg %p1116
    $region58: #{block_forward.1} parent=5 // pred_check_branch
      %1119 = sbr.rel (%p1117) target = $region60
    $region59: #{block_forward.1} parent=5 // pred_region
      %s1120 = ssub.s32 %s14, 2
      // Predicated region
      $region61: #{block_forward.1} parent=59 // pred_check
        %p1121 = pneg %p216
      $region62: #{block_forward.1} parent=59 // pred_check_branch
        %1123 = sbr.rel (%p1121) target = $region64
      $region63: #{block_forward.1} parent=59 // pred_region
        %s1124 = smul.u32 4, %s20
        %p1125 = scmp.lt.s32.totalorder %s1124, 7
        %s1126 = scalar_select %p1125, %s1124, 7
        %s1127 = smul.addr %s1126, 8
        %s1128 = scalar_lea.vmem %s8, %s1127
      $region64: #{block_forward.1} parent=59 // pred_fallthru
        _
    $region60: #{block_forward.1} parent=5 // pred_fallthru
      _
  $region6: #{block_forward.1} parent=0 // loop_footer
    %s18 = sadd.s32 1, %s14
  $region7: #{block_forward.1} parent=0 // loop_footer_branch
    %13 = sbr.rel target = $region3
  $region8: #{block_forward.1} parent=0 // loop_exit
    _

</llo_original>
